<compile_context>
chip_gen: v6e
topology: v6e:2x2x1
jax: 0.10.0
libtpu: 0.0.40
codegen_flags: <defaults>
</compile_context>

<pallas_src>
import jax
import jax.numpy as jnp
from jax.experimental import pallas as pl
from jax.experimental.pallas import tpu as pltpu


def _round_up(x, m):
    return (x + m - 1) // m * m


def _cdiv(a, b):
    return -(-a // b)


def _vmem_capacity_bytes():
    try:
        return int(pltpu.get_tpu_info().vmem_capacity_bytes)
    except Exception:
        return 64 << 20  # conservative: v7x per-TensorCore VMEM


def _spec(block_shape, index_map, buffer_count=None):
    """BlockSpec with optional explicit buffer count (graceful fallback)."""
    if buffer_count is not None and hasattr(pl, "Buffered"):
        try:
            return pl.BlockSpec(block_shape, index_map,
                                pipeline_mode=pl.Buffered(buffer_count))
        except TypeError:
            pass
    return pl.BlockSpec(block_shape, index_map)


def _node_predictor_kernel(x_ref, w1_ref, b1_ref, w2_ref, b2_ref, o_ref, acc_ref):
    k = pl.program_id(1)

    @pl.when(k == 0)
    def _init():
        acc_ref[...] = jnp.zeros_like(acc_ref)

    # h_chunk = relu(x @ W1[:, chunk] + b1[chunk]); bf16 MXU matmul, f32 acc.
    x = x_ref[...].astype(w1_ref.dtype)
    h = jnp.dot(x, w1_ref[...], preferred_element_type=jnp.float32)
    h = jnp.maximum(h + b1_ref[...], 0.0)

    # out += h_chunk @ W2[chunk, :]; accumulate across hidden chunks in f32.
    # TODO(synk): keep h in f32 for the 2nd matmul if accuracy headroom is tight.
    acc_ref[...] += jnp.dot(h.astype(w2_ref.dtype), w2_ref[...],
                            preferred_element_type=jnp.float32)

    @pl.when(k == pl.num_programs(1) - 1)
    def _finalize():
        o_ref[...] = (acc_ref[...] + b2_ref[...]).astype(o_ref.dtype)


def prepare_node_predictor_params(w1, b1, w2, b2, *, compute_dtype=jnp.bfloat16):
    """Pad feature dims to the 128-lane grid and cast to the MXU dtype ONCE.

    Call this at init and reuse the result across forwards (hoists the weight
    pad/cast HBM pass out of the per-call path).
    Weights are (in_features, out_features):  y = x @ W + b.
    """
    in_dim = int(w1.shape[0])
    out_dim = int(w2.shape[1])
    in_p = _round_up(in_dim, 128)
    out_p = _round_up(out_dim, 128)
    # Zero padding keeps semantics exact: padded x columns hit zero W1 rows,
    # padded hidden units have zero weight/bias (relu(0)=0 -> zero W2 rows),
    # padded output columns are sliced away in node_predictor().
    w1_p = jnp.zeros((in_p, in_p), compute_dtype).at[:in_dim, :in_dim].set(
        w1.astype(compute_dtype))
    b1_p = jnp.zeros((1, in_p), jnp.float32).at[0, :in_dim].set(
        b1.astype(jnp.float32))
    w2_p = jnp.zeros((in_p, out_p), compute_dtype).at[:in_dim, :out_dim].set(
        w2.astype(compute_dtype))
    b2_p = jnp.zeros((1, out_p), jnp.float32).at[0, :out_dim].set(
        b2.astype(jnp.float32))
    return {"w1": w1_p, "b1": b1_p, "w2": w2_p, "b2": b2_p,
            "in_dim": in_dim, "out_dim": out_dim}


def node_predictor(node_embed, params, *, row_tile=None, out_dtype=None):
    """Fused MLP forward: (N, in_dim) -> (N, out_dim) == torch Linear->ReLU->Linear."""
    N, in_dim = node_embed.shape
    assert in_dim == params["in_dim"], "input width does not match prepared params"
    out_dim = params["out_dim"]
    w1_p, b1_p, w2_p, b2_p = params["w1"], params["b1"], params["w2"], params["b2"]
    in_p, out_p = w1_p.shape[0], w2_p.shape[1]
    c_dtype = w1_p.dtype
    out_dtype = node_embed.dtype if out_dtype is None else out_dtype

    # Tiny-problem bypass: padding to 128x128 tiles would inflate FLOPs/DMA by
    # 16x+ and launch overhead would dwarf the real work on every generation.
    if N < 128 or in_dim < 128:
        x32 = node_embed.astype(jnp.float32)
        h = jnp.maximum(
            x32 @ w1_p[:in_dim, :in_dim].astype(jnp.float32) + b1_p[0, :in_dim], 0.0)
        out = h @ w2_p[:in_dim, :out_dim].astype(jnp.float32) + b2_p[0, :out_dim]
        return out.astype(out_dtype)

    # x: skip the materialized pad pass when already lane-aligned (common case);
    # bf16 cast happens inside the kernel, so x is read from HBM exactly once.
    x_in = node_embed if in_dim == in_p else (
        jnp.zeros((N, in_p), node_embed.dtype).at[:, :in_dim].set(node_embed))

    c_size = jnp.dtype(c_dtype).itemsize
    x_size = jnp.dtype(x_in.dtype).itemsize
    o_size = jnp.dtype(out_dtype).itemsize

    cap = _vmem_capacity_bytes()
    budget = int(cap * 0.8)  # headroom for Mosaic internal scratch

    # Hidden-dim tiling: keep W1/W2 fully VMEM-resident (single-buffered) when
    # they fit in ~half the budget; otherwise stream th-wide chunks of W1
    # columns / W2 rows along a trailing "arbitrary" grid axis (K-tiling),
    # accumulating the output in f32 scratch.
    resident_bytes = (in_p * in_p + in_p * out_p) * c_size
    if resident_bytes <= budget // 2:
        th, w_bufs = in_p, 1
    else:
        w_bufs = 2
        th_max = max(128, (budget // 2) // (w_bufs * (in_p + out_p) * c_size))
        m = in_p // 128
        g = max(g for g in range(1, m + 1) if m % g == 0 and 128 * g <= th_max)
        th = 128 * g
    k_tiles = in_p // th
    resident = k_tiles == 1
    w_bytes = (w_bufs * (in_p * th + th * out_p) * c_size
               + 2 * (in_p + out_p) * 4)  # weight chunks + f32 biases

    # Row tile: large on 128 MiB parts (v5e/v6e), smaller on 64 MiB (v7x);
    # aim for >= ~8 grid steps so double-buffering and both v7x cores engage.
    default_rt = 1024 if cap >= (100 << 20) else 512
    if row_tile is not None:
        default_rt = _round_up(max(128, int(row_tile)), 128)
    rt = max(128, min(default_rt, _round_up(max(_cdiv(N, 8), 128), 128)))

    def _tile_bytes(r):
        return (2 * r * in_p * x_size        # double-buffered x tiles
                + 2 * r * out_p * o_size     # double-buffered out tiles
                + r * out_p * 4              # f32 accumulator scratch
                + r * th * (4 + c_size))     # h intermediate (f32 + cast copy)

    while rt > 128 and w_bytes + _tile_bytes(rt) > budget:
        rt -= 128

    needed = w_bytes + _tile_bytes(rt)
    vmem_limit = int(min(cap, max(needed + needed // 4 + (4 << 20), 32 << 20)))

    grid = (_cdiv(N, rt), k_tiles)

    flops = 2 * N * in_p * (in_p + out_p)
    bytes_accessed = (N * in_p * x_size
                      + (in_p * in_p + in_p * out_p) * c_size
                      * (1 if resident else grid[0])
                      + (in_p + out_p) * 4
                      + N * out_p * o_size)

    out_padded = pl.pallas_call(
        _node_predictor_kernel,
        out_shape=jax.ShapeDtypeStruct((N, out_p), out_dtype),
        grid_spec=pltpu.PrefetchScalarGridSpec(
            num_scalar_prefetch=0,
            grid=grid,
            in_specs=[
                _spec((rt, in_p), lambda i, k: (i, 0)),                            # x rows
                _spec((in_p, th), lambda i, k: (0, k), 1 if resident else None),   # W1 cols
                _spec((1, th), lambda i, k: (0, k), 1 if resident else None),      # b1 chunk
                _spec((th, out_p), lambda i, k: (k, 0), 1 if resident else None),  # W2 rows
                _spec((1, out_p), lambda i, k: (0, 0), 1),                         # b2 const
            ],
            out_specs=pl.BlockSpec((rt, out_p), lambda i, k: (i, 0)),
            scratch_shapes=[pltpu.VMEM((rt, out_p), jnp.float32)],
        ),
        compiler_params=pltpu.CompilerParams(
            dimension_semantics=("parallel", "arbitrary"),
            vmem_limit_bytes=vmem_limit),
        cost_estimate=pl.CostEstimate(
            flops=int(flops), transcendentals=0,
            bytes_accessed=int(bytes_accessed)),
    )(x_in, w1_p, b1_p, w2_p, b2_p)

    return out_padded if out_p == out_dim else out_padded[:, :out_dim]


def _reference(x, w1, b1, w2, b2):
    h = jnp.maximum(x @ w1 + b1, 0.0)
    return h @ w2 + b2


if __name__ == "__main__":
    key = jax.random.PRNGKey(0)

    def make_case(k, N, in_dim, out_dim):
        k_x, k_w1, k_b1, k_w2, k_b2 = jax.random.split(k, 5)
        s = 1.0 / jnp.sqrt(in_dim)
        x = jax.random.normal(k_x, (N, in_dim), jnp.float32)
        w1 = jax.random.uniform(k_w1, (in_dim, in_dim), jnp.float32, -s, s)
        b1 = jax.random.uniform(k_b1, (in_dim,), jnp.float32, -s, s)
        w2 = jax.random.uniform(k_w2, (in_dim, out_dim), jnp.float32, -s, s)
        b2 = jax.random.uniform(k_b2, (out_dim,), jnp.float32, -s, s)
        return x, w1, b1, w2, b2

    cases = [
        (8, 32, 16),       # tiny   -> XLA bypass (padding would inflate work 16x+)
        (384, 128, 128),   # aligned -> Pallas, x passed straight through (no pad pass)
        (300, 192, 72),    # unaligned -> Pallas, feature zero-padding + output slice
    ]
    keys = jax.random.split(key, len(cases))
    for ck, (N, din, dout) in zip(keys, cases):
        x, w1, b1, w2, b2 = make_case(ck, N, din, dout)
        params = prepare_node_predictor_params(w1, b1, w2, b2)  # pad/cast ONCE
        out = jax.block_until_ready(node_predictor(x, params))
        ref = _reference(x, w1, b1, w2, b2)
        assert out.shape == (N, dout), f"bad shape @ {(N, din, dout)}"
        # bf16 matmul inputs with f32 accumulation -> loosened tolerance vs f32 ref.
        assert jnp.allclose(out, ref, atol=2e-2, rtol=2e-2), \
            f"mismatch vs reference @ {(N, din, dout)}"

    print("KERNEL_OK")
</pallas_src>

<mosaic_0001>
module attributes {stable_mosaic.version = 11 : i64} {
  func.func @_node_predictor_kernel(%arg0: i32, %arg1: i32, %arg2: memref<128x128xf32, #tpu.memory_space<vmem>>, %arg3: memref<128x128xbf16, #tpu.memory_space<vmem>>, %arg4: memref<1x128xf32, #tpu.memory_space<vmem>>, %arg5: memref<128x128xbf16, #tpu.memory_space<vmem>>, %arg6: memref<1x128xf32, #tpu.memory_space<vmem>>, %arg7: memref<128x128xf32, #tpu.memory_space<vmem>>, %arg8: memref<128x128xf32, #tpu.memory_space<vmem>>) attributes {dimension_semantics = [#tpu.dimension_semantics<parallel>, #tpu.dimension_semantics<arbitrary>], iteration_bounds = array<i64: 3, 1>, scalar_prefetch = 0 : i64, scratch_operands = 1 : i64, tpu.core_type = #tpu.core_type<tc>, window_params = [{transform_indices = @transform_0, window_bounds = array<i64: 128, 128>}, {pipeline_mode = #tpu.pipeline_mode<synchronous>, transform_indices = @transform_1, window_bounds = array<i64: 128, 128>}, {pipeline_mode = #tpu.pipeline_mode<synchronous>, transform_indices = @transform_2, window_bounds = array<i64: 1, 128>}, {pipeline_mode = #tpu.pipeline_mode<synchronous>, transform_indices = @transform_3, window_bounds = array<i64: 128, 128>}, {pipeline_mode = #tpu.pipeline_mode<synchronous>, transform_indices = @transform_4, window_bounds = array<i64: 1, 128>}, {transform_indices = @transform_5, window_bounds = array<i64: 128, 128>}]} {
    %c0_i32 = arith.constant 0 : i32
    %0 = arith.cmpi eq, %arg1, %c0_i32 : i32
    %1 = arith.extui %0 : i1 to i32
    %c0_i32_0 = arith.constant 0 : i32
    %2 = arith.cmpi ne, %1, %c0_i32_0 : i32
    scf.if %2 {
      %cst_16 = arith.constant 0.000000e+00 : f32
      %21 = vector.broadcast %cst_16 : f32 to vector<128x128xf32>
      %c0_17 = arith.constant 0 : index
      %c0_18 = arith.constant 0 : index
      %22 = vector.load %arg8[%c0_17, %c0_18] : memref<128x128xf32, #tpu.memory_space<vmem>>, vector<128x128xf32>
      tpu.vector_store %arg8[%c0_17, %c0_18], %21 {strides = array<i32>} : memref<128x128xf32, #tpu.memory_space<vmem>>, vector<128x128xf32>,
    } else {
    }
    %c0 = arith.constant 0 : index
    %c0_1 = arith.constant 0 : index
    %3 = vector.load %arg2[%c0, %c0_1] : memref<128x128xf32, #tpu.memory_space<vmem>>, vector<128x128xf32>
    %4 = arith.truncf %3 : vector<128x128xf32> to vector<128x128xbf16>
    %c0_2 = arith.constant 0 : index
    %c0_3 = arith.constant 0 : index
    %5 = vector.load %arg3[%c0_2, %c0_3] : memref<128x128xbf16, #tpu.memory_space<vmem>>, vector<128x128xbf16>
    %cst = arith.constant dense<0.000000e+00> : vector<128x128xf32>
    %6 = tpu.matmul %4, %5, %cst {dimension_numbers = #tpu.dot_dimension_numbers<[1], [0], [0], [1], [0, 0, 1, 1], [], []>} : vector<128x128xbf16>, vector<128x128xbf16>, vector<128x128xf32> -> vector<128x128xf32>
    %c0_4 = arith.constant 0 : index
    %c0_5 = arith.constant 0 : index
    %7 = vector.load %arg4[%c0_4, %c0_5] : memref<1x128xf32, #tpu.memory_space<vmem>>, vector<1x128xf32>
    %8 = vector.broadcast %7 : vector<1x128xf32> to vector<128x128xf32>
    %9 = arith.addf %6, %8 : vector<128x128xf32>
    %cst_6 = arith.constant 0.000000e+00 : f32
    %10 = vector.broadcast %cst_6 : f32 to vector<128x128xf32>
    %11 = arith.maximumf %9, %10 : vector<128x128xf32>
    %c0_7 = arith.constant 0 : index
    %c0_8 = arith.constant 0 : index
    %12 = vector.load %arg8[%c0_7, %c0_8] : memref<128x128xf32, #tpu.memory_space<vmem>>, vector<128x128xf32>
    %13 = arith.truncf %11 : vector<128x128xf32> to vector<128x128xbf16>
    %c0_9 = arith.constant 0 : index
    %c0_10 = arith.constant 0 : index
    %14 = vector.load %arg5[%c0_9, %c0_10] : memref<128x128xbf16, #tpu.memory_space<vmem>>, vector<128x128xbf16>
    %cst_11 = arith.constant dense<0.000000e+00> : vector<128x128xf32>
    %15 = tpu.matmul %13, %14, %cst_11 {dimension_numbers = #tpu.dot_dimension_numbers<[1], [0], [0], [1], [0, 0, 1, 1], [], []>} : vector<128x128xbf16>, vector<128x128xbf16>, vector<128x128xf32> -> vector<128x128xf32>
    %16 = arith.addf %12, %15 : vector<128x128xf32>
    %c0_12 = arith.constant 0 : index
    %c0_13 = arith.constant 0 : index
    %17 = vector.load %arg8[%c0_12, %c0_13] : memref<128x128xf32, #tpu.memory_space<vmem>>, vector<128x128xf32>
    tpu.vector_store %arg8[%c0_12, %c0_13], %16 {strides = array<i32>} : memref<128x128xf32, #tpu.memory_space<vmem>>, vector<128x128xf32>,
    %c0_i32_14 = arith.constant 0 : i32
    %18 = arith.cmpi eq, %arg1, %c0_i32_14 : i32
    %19 = arith.extui %18 : i1 to i32
    %c0_i32_15 = arith.constant 0 : i32
    %20 = arith.cmpi ne, %19, %c0_i32_15 : i32
    scf.if %20 {
      %c0_16 = arith.constant 0 : index
      %c0_17 = arith.constant 0 : index
      %21 = vector.load %arg8[%c0_16, %c0_17] : memref<128x128xf32, #tpu.memory_space<vmem>>, vector<128x128xf32>
      %c0_18 = arith.constant 0 : index
      %c0_19 = arith.constant 0 : index
      %22 = vector.load %arg6[%c0_18, %c0_19] : memref<1x128xf32, #tpu.memory_space<vmem>>, vector<1x128xf32>
      %23 = vector.broadcast %22 : vector<1x128xf32> to vector<128x128xf32>
      %24 = arith.addf %21, %23 : vector<128x128xf32>
      %c0_20 = arith.constant 0 : index
      %c0_21 = arith.constant 0 : index
      %25 = vector.load %arg7[%c0_20, %c0_21] : memref<128x128xf32, #tpu.memory_space<vmem>>, vector<128x128xf32>
      tpu.vector_store %arg7[%c0_20, %c0_21], %24 {strides = array<i32>} : memref<128x128xf32, #tpu.memory_space<vmem>>, vector<128x128xf32>,
    } else {
    }
    return
  }
  func.func @transform_0(%arg0: i32, %arg1: i32) -> (i32, i32) {
    %c0_i32 = arith.constant 0 : i32
    %c0_i32_0 = arith.constant 0 : i32
    return %arg0, %c0_i32 : i32, i32
  }
  func.func @transform_1(%arg0: i32, %arg1: i32) -> (i32, i32) {
    %c0_i32 = arith.constant 0 : i32
    %c0_i32_0 = arith.constant 0 : i32
    return %c0_i32, %arg1 : i32, i32
  }
  func.func @transform_2(%arg0: i32, %arg1: i32) -> (i32, i32) {
    %c0_i32 = arith.constant 0 : i32
    %c0_i32_0 = arith.constant 0 : i32
    return %c0_i32, %arg1 : i32, i32
  }
  func.func @transform_3(%arg0: i32, %arg1: i32) -> (i32, i32) {
    %c0_i32 = arith.constant 0 : i32
    %c0_i32_0 = arith.constant 0 : i32
    return %arg1, %c0_i32 : i32, i32
  }
  func.func @transform_4(%arg0: i32, %arg1: i32) -> (i32, i32) {
    %c0_i32 = arith.constant 0 : i32
    %c0_i32_0 = arith.constant 0 : i32
    %c0_i32_1 = arith.constant 0 : i32
    return %c0_i32, %c0_i32_0 : i32, i32
  }
  func.func @transform_5(%arg0: i32, %arg1: i32) -> (i32, i32) {
    %c0_i32 = arith.constant 0 : i32
    %c0_i32_0 = arith.constant 0 : i32
    return %arg0, %c0_i32 : i32, i32
  }
}

</mosaic_0001>

<llo_original>
// kernel: tpu_custom_call.1
$region0: #{tpu_custom_call.1}
  #allocation0 [shape = 'u32[]', space=smem, size = 0x4, offset = 0x4, fixed_abs, tag = 'smem constant byte address 0x4 - core index']
  #allocation1 [shape = 'u32[144,128]{1,0:T(1,128)}', space=vmem, size = 0x12000, scoped, tag = 'internal scratch']
  #allocation2 [shape = 'f32[128,128]{1,0:T(8,128)}', space=vmem, size = 0x10000, scoped, tag = 'scratch operand']
  %s0 = inlined_call_operand.hbm [shape: f32[384,128], index: 0, kind: input, shape index: {}]
  %s1 = inlined_call_operand.hbm [shape: bf16[128,128], index: 1, kind: input, shape index: {}]
  %s2 = inlined_call_operand.vmem [shape: f32[1,128], index: 2, kind: input, shape index: {}]
  %s3 = inlined_call_operand.hbm [shape: bf16[128,128], index: 3, kind: input, shape index: {}]
  %s4 = inlined_call_operand.vmem [shape: f32[1,128], index: 4, kind: input, shape index: {}]
  %s5 = inlined_call_operand.hbm [shape: f32[384,128], index: 5, kind: output, shape index: {}]
  %s6 = sld [smem:[#allocation0]]
  $region73: #{tpu_custom_call.1} parent=0
    _
  %s8 = ssub.s32 1, %s6
  %s9 = scalar_select 0, %s8, %s6
  $region1: #{tpu_custom_call.1} parent=0
    #allocation3 [shape = 'u8[131072]{0}', space=vmem, size = 0x20000, scoped, tag = 'input window, operand 0']
    #allocation4 [shape = 's32[2]{0}', space=sflag, size = 0x8, scoped, tag = 'scoped memory for tpu_custom_call.1']
    #allocation5 [shape = 's32[2]{0}', space=sflag, size = 0x8, scoped, tag = 'scoped memory for tpu_custom_call.1']
    #allocation6 [shape = 'u8[32768]{0}', space=vmem, size = 0x8000, scoped, tag = 'input window, operand 1, single buffered']
    #allocation7 [shape = 's32[1]{0}', space=sflag, size = 0x4, scoped, tag = 'scoped memory for tpu_custom_call.1']
    #allocation8 [shape = 'u8[32768]{0}', space=vmem, size = 0x8000, scoped, tag = 'input window, operand 3, single buffered']
    #allocation9 [shape = 'u8[131072]{0}', space=vmem, size = 0x20000, scoped, tag = 'output window, operand 0']
    %10 = vsyncpa [#allocation4], 0
    %s11 = scalar_lea.sflag [#allocation4], 1
    %12 = vsyncpa %s11, 0
    %13 = vsyncpa [#allocation7], 0
    %14 = vsyncpa [#allocation5], 0
    %s15 = scalar_lea.sflag [#allocation5], 1
    %16 = vsyncpa %s15, 0
    loop: start=0, step=1, limit=5
    $region2: #{tpu_custom_call.1} parent=1 // loop_pre_header
      _
    $region3: #{tpu_custom_call.1} parent=1 // loop_header
      %s18 = sphi 0, %s22
      %p19 = scmp.ge.s32.totalorder %s18, 5
      %s25 = sphi 0, %s37
      %s26 = sphi 0, %s33
      %s27 = sphi 0, %s25
      %s28 = sphi 0, %s26
      %s29 = sphi 0, %s27
      %s30 = sphi 0, %s28
      %s40 = sphi 0, %s42
      %s43 = sphi 0, %s40
      %s44 = sphi 0, %s43
      %s60 = sphi 0, %s44
      %s66 = sphi 0, %s68
      %s69 = sphi 0, %s66
      %s70 = sphi 0, %s69
      %s86 = sphi 0, %s70
      %s92 = sphi 0, %s94
      %s95 = sphi 0, %s92
      %s96 = sphi 0, %s95
      %s112 = sphi 0, %s96
      %s118 = sphi 0, %s120
      %s121 = sphi 0, %s118
      %s122 = sphi 0, %s121
      %s138 = sphi 0, %s122
      %s142 = sphi 0, %s142
      %s144 = sphi 0, %s142
      %s145 = sphi 0, %s144
      %s159 = sphi 0, %s145
      %s165 = sphi 0, %s167
      %s168 = sphi 0, %s165
      %s169 = sphi 0, %s168
      %s185 = sphi 0, %s169
    $region4: #{tpu_custom_call.1} parent=1 // loop_header_branch
      %21 = sbr.rel (%p19) target = $region8
    $region5: #{tpu_custom_call.1} parent=1 // loop_body
      %s23 = ssub.s32 %s18, 1
      %s24 = ssub.s32 %s18, 2
      %s31 = sadd.s32 1, %s26
      %p32 = scmp.ge.s32.totalorder %s31, 1
      %s33 = scalar_select %p32, 0, %s31
      %s34 = sadd.s32 1, %s25
      %s35 = scalar_select %p32, %s34, %s25
      %p36 = scmp.ge.s32.totalorder %s35, 3
      %s37 = scalar_select %p36, 0, %s35
      %s38 = ssub.s32 %s25, %s37
      %p39 = scmp.eq.s32.totalorder %s38, 0
      %s41 = sadd.s32 %s40, 1
      %s42 = scalar_select %p39, %s40, %s41
      %p45 = pneg %p39
      %p46 = scmp.eq.s32.totalorder %s18, 2
      %p47 = por %p45, %p46
      %p48 = scmp.ne.s32.totalorder %s40, %s43
      %p49 = scmp.eq.s32.totalorder %s18, 0
      %p50 = por %p48, %p49
      %p51 = scmp.ne.s32.totalorder %s40, %s43
      %p52 = scmp.eq.s32.totalorder %s23, 2
      %p53 = por %p51, %p52
      %p54 = scmp.ne.s32.totalorder %s43, %s44
      %p55 = scmp.eq.s32.totalorder %s23, 0
      %p56 = por %p54, %p55
      %p57 = scmp.ne.s32.totalorder %s43, %s44
      %p58 = scmp.eq.s32.totalorder %s24, 2
      %p59 = por %p57, %p58
      %p61 = scmp.ne.s32.totalorder %s44, %s60
      %p62 = scmp.eq.s32.totalorder %s24, 0
      %p63 = por %p61, %p62
      %s64 = ssub.s32 %s26, %s33
      %p65 = scmp.eq.s32.totalorder %s64, 0
      %s67 = sadd.s32 %s66, 1
      %s68 = scalar_select %p65, %s66, %s67
      %p71 = pneg %p65
      %p72 = scmp.eq.s32.totalorder %s18, 2
      %p73 = por %p71, %p72
      %p74 = scmp.ne.s32.totalorder %s66, %s69
      %p75 = scmp.eq.s32.totalorder %s18, 0
      %p76 = por %p74, %p75
      %p77 = scmp.ne.s32.totalorder %s66, %s69
      %p78 = scmp.eq.s32.totalorder %s23, 2
      %p79 = por %p77, %p78
      %p80 = scmp.ne.s32.totalorder %s69, %s70
      %p81 = scmp.eq.s32.totalorder %s23, 0
      %p82 = por %p80, %p81
      %p83 = scmp.ne.s32.totalorder %s69, %s70
      %p84 = scmp.eq.s32.totalorder %s24, 2
      %p85 = por %p83, %p84
      %p87 = scmp.ne.s32.totalorder %s70, %s86
      %p88 = scmp.eq.s32.totalorder %s24, 0
      %p89 = por %p87, %p88
      %s90 = ssub.s32 %s26, %s33
      %p91 = scmp.eq.s32.totalorder %s90, 0
      %s93 = sadd.s32 %s92, 1
      %s94 = scalar_select %p91, %s92, %s93
      %p97 = pneg %p91
      %p98 = scmp.eq.s32.totalorder %s18, 2
      %p99 = por %p97, %p98
      %p100 = scmp.ne.s32.totalorder %s92, %s95
      %p101 = scmp.eq.s32.totalorder %s18, 0
      %p102 = por %p100, %p101
      %p103 = scmp.ne.s32.totalorder %s92, %s95
      %p104 = scmp.eq.s32.totalorder %s23, 2
      %p105 = por %p103, %p104
      %p106 = scmp.ne.s32.totalorder %s95, %s96
      %p107 = scmp.eq.s32.totalorder %s23, 0
      %p108 = por %p106, %p107
      %p109 = scmp.ne.s32.totalorder %s95, %s96
      %p110 = scmp.eq.s32.totalorder %s24, 2
      %p111 = por %p109, %p110
      %p113 = scmp.ne.s32.totalorder %s96, %s112
      %p114 = scmp.eq.s32.totalorder %s24, 0
      %p115 = por %p113, %p114
      %s116 = ssub.s32 %s26, %s33
      %p117 = scmp.eq.s32.totalorder %s116, 0
      %s119 = sadd.s32 %s118, 1
      %s120 = scalar_select %p117, %s118, %s119
      %p123 = pneg %p117
      %p124 = scmp.eq.s32.totalorder %s18, 2
      %p125 = por %p123, %p124
      %p126 = scmp.ne.s32.totalorder %s118, %s121
      %p127 = scmp.eq.s32.totalorder %s18, 0
      %p128 = por %p126, %p127
      %p129 = scmp.ne.s32.totalorder %s118, %s121
      %p130 = scmp.eq.s32.totalorder %s23, 2
      %p131 = por %p129, %p130
      %p132 = scmp.ne.s32.totalorder %s121, %s122
      %p133 = scmp.eq.s32.totalorder %s23, 0
      %p134 = por %p132, %p133
      %p135 = scmp.ne.s32.totalorder %s121, %s122
      %p136 = scmp.eq.s32.totalorder %s24, 2
      %p137 = por %p135, %p136
      %p139 = scmp.ne.s32.totalorder %s122, %s138
      %p140 = scmp.eq.s32.totalorder %s24, 0
      %p141 = por %p139, %p140
      %s143 = sadd.s32 %s142, 1
      %p146 = scmp.eq.s32.totalorder %s18, 2
      %p147 = scmp.ne.s32.totalorder %s142, %s144
      %p148 = scmp.eq.s32.totalorder %s18, 0
      %p149 = por %p147, %p148
      %p150 = scmp.ne.s32.totalorder %s142, %s144
      %p151 = scmp.eq.s32.totalorder %s23, 2
      %p152 = por %p150, %p151
      %p153 = scmp.ne.s32.totalorder %s144, %s145
      %p154 = scmp.eq.s32.totalorder %s23, 0
      %p155 = por %p153, %p154
      %p156 = scmp.ne.s32.totalorder %s144, %s145
      %p157 = scmp.eq.s32.totalorder %s24, 2
      %p158 = por %p156, %p157
      %p160 = scmp.ne.s32.totalorder %s145, %s159
      %p161 = scmp.eq.s32.totalorder %s24, 0
      %p162 = por %p160, %p161
      %s163 = ssub.s32 %s25, %s37
      %p164 = scmp.eq.s32.totalorder %s163, 0
      %s166 = sadd.s32 %s165, 1
      %s167 = scalar_select %p164, %s165, %s166
      %p170 = pneg %p164
      %p171 = scmp.eq.s32.totalorder %s18, 2
      %p172 = por %p170, %p171
      %p173 = scmp.ne.s32.totalorder %s165, %s168
      %p174 = scmp.eq.s32.totalorder %s18, 0
      %p175 = por %p173, %p174
      %p176 = scmp.ne.s32.totalorder %s165, %s168
      %p177 = scmp.eq.s32.totalorder %s23, 2
      %p178 = por %p176, %p177
      %p179 = scmp.ne.s32.totalorder %s168, %s169
      %p180 = scmp.eq.s32.totalorder %s23, 0
      %p181 = por %p179, %p180
      %p182 = scmp.ne.s32.totalorder %s168, %s169
      %p183 = scmp.eq.s32.totalorder %s24, 2
      %p184 = por %p182, %p183
      %p186 = scmp.ne.s32.totalorder %s169, %s185
      %p187 = scmp.eq.s32.totalorder %s24, 0
      %p188 = por %p186, %p187
      %p189 = scmp.le.s32.totalorder 1, %s18
      %p190 = scmp.lt.s32.totalorder %s18, 4
      %p191 = pnand %p189, %p190
      %p192 = pneg %p191
      // Predicated region
      $region9: #{tpu_custom_call.1} parent=5 // pred_check
        _
      $region10: #{tpu_custom_call.1} parent=5 // pred_check_branch
        %194 = sbr.rel (%p191) target = $region12
      $region11: #{tpu_custom_call.1} parent=5 // pred_region
        %s195 = ssub.s32 %s18, 1
        // Predicated region
        $region13: #{tpu_custom_call.1} parent=11 // pred_check
          %p196 = pneg %p82
        $region14: #{tpu_custom_call.1} parent=11 // pred_check_branch
          %198 = sbr.rel (%p196) target = $region16
        $region15: #{tpu_custom_call.1} parent=11 // pred_region
          %s200 = ssub.s32 1024, 1024
          %201 = vsyncadd [#allocation7], %s200
          %s202 = smul.addr %s28, 64
          %s203 = scalar_lea.hbm %s1, %s202
          %s204 = sshll.u32 [#allocation6], 4
          %s205 = int_to_ptr.vmem [resolvable:$true] %s204
          %210 = dma.hbm_to_vmem [thread:$0]  %s203, 1024, %s205, [#allocation7], 64, 64, 4
        $region16: #{tpu_custom_call.1} parent=11 // pred_fallthru
          _
        // Predicated region
        $region17: #{tpu_custom_call.1} parent=11 // pred_check
          %p211 = pneg %p108
        $region18: #{tpu_custom_call.1} parent=11 // pred_check_branch
          %213 = sbr.rel (%p211) target = $region20
        $region19: #{tpu_custom_call.1} parent=11 // pred_region
          %p214 = scmp.lt.s32.totalorder %s28, 0
          %s215 = scalar_select %p214, %s28, 0
          %s216 = scalar_lea.vmem %s2, %s215
        $region20: #{tpu_custom_call.1} parent=11 // pred_fallthru
          _
        // Predicated region
        $region21: #{tpu_custom_call.1} parent=11 // pred_check
          %p217 = pneg %p134
        $region22: #{tpu_custom_call.1} parent=11 // pred_check_branch
          %219 = sbr.rel (%p217) target = $region24
        $region23: #{tpu_custom_call.1} parent=11 // pred_region
          %s220 = smul.u32 16, %s28
          %s222 = ssub.s32 1024, 1024
          %223 = vsyncadd [#allocation7], %s222
          %s224 = smul.addr %s220, 64
          %s225 = scalar_lea.hbm %s3, %s224
          %s226 = sshll.u32 [#allocation8], 4
          %s227 = int_to_ptr.vmem [resolvable:$true] %s226
          %232 = dma.hbm_to_vmem [thread:$0]  %s225, 1024, %s227, [#allocation7], 64, 64, 4
        $region24: #{tpu_custom_call.1} parent=11 // pred_fallthru
          _
        // Predicated region
        $region25: #{tpu_custom_call.1} parent=11 // pred_check
          %p233 = pneg %p155
        $region26: #{tpu_custom_call.1} parent=11 // pred_check_branch
          %235 = sbr.rel (%p233) target = $region28
        $region27: #{tpu_custom_call.1} parent=11 // pred_region
          _
        $region28: #{tpu_custom_call.1} parent=11 // pred_fallthru
          _
      $region12: #{tpu_custom_call.1} parent=5 // pred_fallthru
        _
      %p236 = scmp.lt.s32.totalorder %s18, 3
      // Predicated region
      $region29: #{tpu_custom_call.1} parent=5 // pred_check
        %p237 = pneg %p236
      $region30: #{tpu_custom_call.1} parent=5 // pred_check_branch
        %239 = sbr.rel (%p237) target = $region32
      $region31: #{tpu_custom_call.1} parent=5 // pred_region
        // Predicated region
        $region33: #{tpu_custom_call.1} parent=31 // pred_check
          %p240 = pneg %p50
        $region34: #{tpu_custom_call.1} parent=31 // pred_check_branch
          %242 = sbr.rel (%p240) target = $region36
        $region35: #{tpu_custom_call.1} parent=31 // pred_region
          %s243 = sand.u32 %s40, 1
          %s244 = scalar_lea.sflag [#allocation4], %s243
          %s245 = sand.u32 %s40, 1
          %s246 = smul.addr %s245, 128
          %s247 = scalar_lea.vmem [#allocation3], %s246
          %s248 = smul.u32 16, %s25
          %s250 = ssub.s32 2048, 2048
          %251 = vsyncadd %s244, %s250
          %s252 = smul.addr %s248, 128
          %s253 = scalar_lea.hbm %s0, %s252
          %s254 = sshll.u32 %s247, 4
          %s255 = int_to_ptr.vmem [resolvable:$true] %s254
          %260 = dma.hbm_to_vmem [thread:$0]  %s253, 2048, %s255, %s244, 128, 128, 8
        $region36: #{tpu_custom_call.1} parent=31 // pred_fallthru
          _
      $region32: #{tpu_custom_call.1} parent=5 // pred_fallthru
        _
      %p261 = scmp.le.s32.totalorder 1, %s18
      %p262 = scmp.lt.s32.totalorder %s18, 4
      %p263 = pnand %p261, %p262
      %p264 = pneg %p263
      // Predicated region
      $region37: #{tpu_custom_call.1} parent=5 // pred_check
        _
      $region38: #{tpu_custom_call.1} parent=5 // pred_check_branch
        %266 = sbr.rel (%p263) target = $region40
      $region39: #{tpu_custom_call.1} parent=5 // pred_region
        %s267 = ssub.s32 %s18, 1
        %s268 = sand.u32 %s43, 1
        %s269 = scalar_lea.sflag [#allocation4], %s268
        %s270 = sand.u32 %s43, 1
        %s271 = smul.addr %s270, 128
        %s272 = scalar_lea.vmem [#allocation3], %s271
        // Predicated region
        $region41: #{tpu_custom_call.1} parent=39 // pred_check
          %p273 = pneg %p56
        $region42: #{tpu_custom_call.1} parent=39 // pred_check_branch
          %275 = sbr.rel (%p273) target = $region44
        $region43: #{tpu_custom_call.1} parent=39 // pred_region
          %276 = dma.done %s269, 2048
        $region44: #{tpu_custom_call.1} parent=39 // pred_fallthru
          _
        // Predicated region
        $region45: #{tpu_custom_call.1} parent=39 // pred_check
          %p277 = pneg %p82
        $region46: #{tpu_custom_call.1} parent=39 // pred_check_branch
          %279 = sbr.rel (%p277) target = $region48
        $region47: #{tpu_custom_call.1} parent=39 // pred_region
          %280 = dma.done [#allocation7], 1024
        $region48: #{tpu_custom_call.1} parent=39 // pred_fallthru
          _
        // Predicated region
        $region49: #{tpu_custom_call.1} parent=39 // pred_check
          %p281 = pneg %p134
        $region50: #{tpu_custom_call.1} parent=39 // pred_check_branch
          %283 = sbr.rel (%p281) target = $region52
        $region51: #{tpu_custom_call.1} parent=39 // pred_region
          %284 = dma.done [#allocation7], 1024
        $region52: #{tpu_custom_call.1} parent=39 // pred_fallthru
          _
        %s285 = sand.u32 %s43, 1
        %s286 = scalar_lea.sflag [#allocation4], %s285
        %s287 = sand.u32 %s43, 1
        %s288 = smul.addr %s287, 128
        %s289 = scalar_lea.vmem [#allocation3], %s288
        %p290 = pneg %p56
        %p291 = pneg %p53
        %p292 = pneg %p82
        %p293 = pneg %p79
        %p294 = scmp.lt.s32.totalorder %s28, 0
        %s295 = scalar_select %p294, %s28, 0
        %s296 = scalar_lea.vmem %s2, %s295
        %p297 = pneg %p108
        %p298 = pneg %p105
        %p299 = pneg %p134
        %p300 = pneg %p131
        %p301 = pneg %p155
        %p302 = pneg %p152
        %p303 = pneg %p181
        %p304 = pneg %p178
        %s305 = sand.u32 %s168, 1
        %s306 = scalar_lea.sflag [#allocation5], %s305
        %s307 = sand.u32 %s168, 1
        %s308 = smul.addr %s307, 128
        %s309 = scalar_lea.vmem [#allocation9], %s308
        %s310 = smul.u32 16, %s27
        %p311 = scmp.lt.s32.totalorder %s28, 0
        %s312 = scalar_select %p311, %s28, 0
        %s313 = scalar_lea.vmem %s2, %s312
        %s314 = smul.u32 16, %s28
        %s315 = smul.u32 16, %s27
        %p317 = scmp.eq.s32.totalorder %s28, 0
        // Predicated region
        $region53: #{tpu_custom_call.1} parent=39 // pred_check
          %p318 = pneg %p317
        $region54: #{tpu_custom_call.1} parent=39 // pred_check_branch
          %320 = sbr.rel (%p318) target = $region56
        $region55: #{tpu_custom_call.1} parent=39 // pred_region
          %321 = vst [vmem:[#allocation2] sm:$0xff] 0.0
          %322 = vst [vmem:[#allocation2 + $0x8] sm:$0xff] 0.0
          %323 = vst [vmem:[#allocation2 + $0x10] sm:$0xff] 0.0
          %324 = vst [vmem:[#allocation2 + $0x18] sm:$0xff] 0.0
          %325 = vst [vmem:[#allocation2 + $0x20] sm:$0xff] 0.0
          %326 = vst [vmem:[#allocation2 + $0x28] sm:$0xff] 0.0
          %327 = vst [vmem:[#allocation2 + $0x30] sm:$0xff] 0.0
          %328 = vst [vmem:[#allocation2 + $0x38] sm:$0xff] 0.0
          %329 = vst [vmem:[#allocation2 + $0x40] sm:$0xff] 0.0
          %330 = vst [vmem:[#allocation2 + $0x48] sm:$0xff] 0.0
          %331 = vst [vmem:[#allocation2 + $0x50] sm:$0xff] 0.0
          %332 = vst [vmem:[#allocation2 + $0x58] sm:$0xff] 0.0
          %333 = vst [vmem:[#allocation2 + $0x60] sm:$0xff] 0.0
          %334 = vst [vmem:[#allocation2 + $0x68] sm:$0xff] 0.0
          %335 = vst [vmem:[#allocation2 + $0x70] sm:$0xff] 0.0
          %336 = vst [vmem:[#allocation2 + $0x78] sm:$0xff] 0.0
        $region56: #{tpu_custom_call.1} parent=39 // pred_fallthru
          _
        %v337 = vld [vmem:[%s272] sm:$0xff]
        %v338 = vld [vmem:[%s272 + $0x8] sm:$0xff]
        %v339 = vld [vmem:[%s272 + $0x10] sm:$0xff]
        %v340 = vld [vmem:[%s272 + $0x18] sm:$0xff]
        %v341 = vld [vmem:[%s272 + $0x20] sm:$0xff]
        %v342 = vld [vmem:[%s272 + $0x28] sm:$0xff]
        %v343 = vld [vmem:[%s272 + $0x30] sm:$0xff]
        %v344 = vld [vmem:[%s272 + $0x38] sm:$0xff]
        %v345 = vld [vmem:[%s272 + $0x40] sm:$0xff]
        %v346 = vld [vmem:[%s272 + $0x48] sm:$0xff]
        %v347 = vld [vmem:[%s272 + $0x50] sm:$0xff]
        %v348 = vld [vmem:[%s272 + $0x58] sm:$0xff]
        %v349 = vld [vmem:[%s272 + $0x60] sm:$0xff]
        %v350 = vld [vmem:[%s272 + $0x68] sm:$0xff]
        %v351 = vld [vmem:[%s272 + $0x70] sm:$0xff]
        %v352 = vld [vmem:[%s272 + $0x78] sm:$0xff]
        %v353 = vpack.c.bf16 %v338, %v337
        %v354 = vpack.c.bf16 %v340, %v339
        %v355 = vpack.c.bf16 %v342, %v341
        %v356 = vpack.c.bf16 %v344, %v343
        %v357 = vpack.c.bf16 %v346, %v345
        %v358 = vpack.c.bf16 %v348, %v347
        %v359 = vpack.c.bf16 %v350, %v349
        %v360 = vpack.c.bf16 %v352, %v351
        %v361 = vld [vmem:[#allocation6] sm:$0xf]
        %v362 = vld [vmem:[#allocation6 + $0x4] sm:$0xf]
        %v363 = vld [vmem:[#allocation6 + $0x8] sm:$0xf]
        %v364 = vld [vmem:[#allocation6 + $0xc] sm:$0xf]
        %v365 = vld [vmem:[#allocation6 + $0x10] sm:$0xf]
        %v366 = vld [vmem:[#allocation6 + $0x14] sm:$0xf]
        %v367 = vld [vmem:[#allocation6 + $0x18] sm:$0xf]
        %v368 = vld [vmem:[#allocation6 + $0x1c] sm:$0xf]
        %v369 = vld [vmem:[#allocation6 + $0x20] sm:$0xf]
        %v370 = vld [vmem:[#allocation6 + $0x24] sm:$0xf]
        %v371 = vld [vmem:[#allocation6 + $0x28] sm:$0xf]
        %v372 = vld [vmem:[#allocation6 + $0x2c] sm:$0xf]
        %v373 = vld [vmem:[#allocation6 + $0x30] sm:$0xf]
        %v374 = vld [vmem:[#allocation6 + $0x34] sm:$0xf]
        %v375 = vld [vmem:[#allocation6 + $0x38] sm:$0xf]
        %v376 = vld [vmem:[#allocation6 + $0x3c] sm:$0xf]
        %v377 = vld [vmem:[%s313] sm:$0x1]
        %v379 = vlaneseq
        %v380 = vshrl.u32 %v379, 7
        %v381 = vsub.s32 0, %v380
        %v382 = vrot.slane %v377, %v381
        %v400 = vunpack.c.l.b16 %v361
        %v401 = vunpack.c.l.b16 %v362
        %v402 = vunpack.c.l.b16 %v363
        %v403 = vunpack.c.l.b16 %v364
        %v404 = vunpack.c.l.b16 %v365
        %v405 = vunpack.c.l.b16 %v366
        %v406 = vunpack.c.l.b16 %v367
        %v407 = vunpack.c.l.b16 %v368
        %v408 = vunpack.c.l.b16 %v369
        %v409 = vunpack.c.l.b16 %v370
        %v410 = vunpack.c.l.b16 %v371
        %v411 = vunpack.c.l.b16 %v372
        %v412 = vunpack.c.l.b16 %v373
        %v413 = vunpack.c.l.b16 %v374
        %v414 = vunpack.c.l.b16 %v375
        %v415 = vunpack.c.l.b16 %v376
        %v416 = vpack.c.b16 %v401, %v400
        %v417 = vpack.c.b16 %v403, %v402
        %v418 = vpack.c.b16 %v405, %v404
        %v419 = vpack.c.b16 %v407, %v406
        %v420 = vpack.c.b16 %v409, %v408
        %v421 = vpack.c.b16 %v411, %v410
        %v422 = vpack.c.b16 %v413, %v412
        %v423 = vpack.c.b16 %v415, %v414
        %432 = vmatprep.subr.bf16.mxu0 0
        %433 = vmatpush1.bf16.msra.mxu0 %v423
        %434 = vmatprep.subr.bf16.mxu0 0
        %435 = vmatpush1.bf16.msra.mxu0 %v422
        %436 = vmatprep.subr.bf16.mxu0 0
        %437 = vmatpush1.bf16.msra.mxu0 %v421
        %438 = vmatprep.subr.bf16.mxu0 0
        %439 = vmatpush1.bf16.msra.mxu0 %v420
        %440 = vmatprep.subr.bf16.mxu0 0
        %441 = vmatpush1.bf16.msra.mxu0 %v419
        %442 = vmatprep.subr.bf16.mxu0 0
        %443 = vmatpush1.bf16.msra.mxu0 %v418
        %444 = vmatprep.subr.bf16.mxu0 0
        %445 = vmatpush1.bf16.msra.mxu0 %v417
        %446 = vmatprep.subr.bf16.mxu0 0
        %447 = vmatpush1.bf16.msra.mxu0 %v416
        %448 = vmatprep.subr.bf16.mxu0 0
        %449 = vmatpush2.bf16.msra.mxu0 0
        %450 = vmatprep.subr.bf16.mxu0 0
        %451 = vmatpush2.bf16.msra.mxu0 0
        %452 = vmatprep.subr.bf16.mxu0 0
        %453 = vmatpush2.bf16.msra.mxu0 0
        %454 = vmatprep.subr.bf16.mxu0 0
        %455 = vmatpush2.bf16.msra.mxu0 0
        %456 = vmatprep.subr.bf16.mxu0 0
        %457 = vmatpush2.bf16.msra.mxu0 0
        %458 = vmatprep.subr.bf16.mxu0 0
        %459 = vmatpush2.bf16.msra.mxu0 0
        %460 = vmatprep.subr.bf16.mxu0 0
        %461 = vmatpush2.bf16.msra.mxu0 0
        %462 = vmatprep.subr.bf16.mxu0 0
        %463 = vmatpush2.bf16.msra.mxu0 0
        %464 = vmatprep.mubr.bf16.mxu0 0
        %465 = vmatmul.mubr.bf16.gmra.mxu0 %v353
        %v466 = vpop.f32.mrf.mxu0
        %v467 = vadd.f32 %v382, %v466
        %v468 = vpop.f32.mrf.mxu0
        %v469 = vpop.f32.mrf.mxu0
        %v470 = vadd.f32 %v382, %v469
        %v471 = vpop.f32.mrf.mxu0
        %472 = vmatprep.mubr.bf16.mxu0 0
        %473 = vmatmul.mubr.bf16.gmra.mxu0 %v354
        %v474 = vpop.f32.mrf.mxu0
        %v475 = vadd.f32 %v382, %v474
        %v476 = vpop.f32.mrf.mxu0
        %v477 = vpop.f32.mrf.mxu0
        %v478 = vadd.f32 %v382, %v477
        %v479 = vpop.f32.mrf.mxu0
        %480 = vmatprep.mubr.bf16.mxu0 0
        %481 = vmatmul.mubr.bf16.gmra.mxu0 %v355
        %v482 = vpop.f32.mrf.mxu0
        %v483 = vadd.f32 %v382, %v482
        %v484 = vpop.f32.mrf.mxu0
        %v485 = vpop.f32.mrf.mxu0
        %v486 = vadd.f32 %v382, %v485
        %v487 = vpop.f32.mrf.mxu0
        %488 = vmatprep.mubr.bf16.mxu0 0
        %489 = vmatmul.mubr.bf16.gmra.mxu0 %v356
        %v490 = vpop.f32.mrf.mxu0
        %v491 = vadd.f32 %v382, %v490
        %v492 = vpop.f32.mrf.mxu0
        %v493 = vpop.f32.mrf.mxu0
        %v494 = vadd.f32 %v382, %v493
        %v495 = vpop.f32.mrf.mxu0
        %496 = vmatprep.mubr.bf16.mxu0 0
        %497 = vmatmul.mubr.bf16.gmra.mxu0 %v357
        %v498 = vpop.f32.mrf.mxu0
        %v499 = vadd.f32 %v382, %v498
        %v500 = vpop.f32.mrf.mxu0
        %v501 = vpop.f32.mrf.mxu0
        %v502 = vadd.f32 %v382, %v501
        %v503 = vpop.f32.mrf.mxu0
        %504 = vmatprep.mubr.bf16.mxu0 0
        %505 = vmatmul.mubr.bf16.gmra.mxu0 %v358
        %v506 = vpop.f32.mrf.mxu0
        %v507 = vadd.f32 %v382, %v506
        %v508 = vpop.f32.mrf.mxu0
        %v509 = vpop.f32.mrf.mxu0
        %v510 = vadd.f32 %v382, %v509
        %v511 = vpop.f32.mrf.mxu0
        %512 = vmatprep.mubr.bf16.mxu0 0
        %513 = vmatmul.mubr.bf16.gmra.mxu0 %v359
        %v514 = vpop.f32.mrf.mxu0
        %v515 = vadd.f32 %v382, %v514
        %v516 = vpop.f32.mrf.mxu0
        %v517 = vpop.f32.mrf.mxu0
        %v518 = vadd.f32 %v382, %v517
        %v519 = vpop.f32.mrf.mxu0
        %520 = vmatprep.mubr.bf16.mxu0 0
        %521 = vmatmul.mubr.bf16.gmra.mxu0 %v360
        %v522 = vpop.f32.mrf.mxu0
        %v523 = vadd.f32 %v382, %v522
        %v524 = vpop.f32.mrf.mxu0
        %v525 = vpop.f32.mrf.mxu0
        %v526 = vadd.f32 %v382, %v525
        %v527 = vpop.f32.mrf.mxu0
        %528 = vdwg.mxu0
        %v529 = vmax.f32 %v467, 0.0
        %v530 = vmax.f32 %v470, 0.0
        %v531 = vmax.f32 %v475, 0.0
        %v532 = vmax.f32 %v478, 0.0
        %v533 = vmax.f32 %v483, 0.0
        %v534 = vmax.f32 %v486, 0.0
        %v535 = vmax.f32 %v491, 0.0
        %v536 = vmax.f32 %v494, 0.0
        %v537 = vmax.f32 %v499, 0.0
        %v538 = vmax.f32 %v502, 0.0
        %v539 = vmax.f32 %v507, 0.0
        %v540 = vmax.f32 %v510, 0.0
        %v541 = vmax.f32 %v515, 0.0
        %v542 = vmax.f32 %v518, 0.0
        %v543 = vmax.f32 %v523, 0.0
        %v544 = vmax.f32 %v526, 0.0
        %v545 = vld [vmem:[#allocation2] sm:$0xff]
        %v546 = vld [vmem:[#allocation2 + $0x8] sm:$0xff]
        %v547 = vld [vmem:[#allocation2 + $0x10] sm:$0xff]
        %v548 = vld [vmem:[#allocation2 + $0x18] sm:$0xff]
        %v549 = vld [vmem:[#allocation2 + $0x20] sm:$0xff]
        %v550 = vld [vmem:[#allocation2 + $0x28] sm:$0xff]
        %v551 = vld [vmem:[#allocation2 + $0x30] sm:$0xff]
        %v552 = vld [vmem:[#allocation2 + $0x38] sm:$0xff]
        %v553 = vld [vmem:[#allocation2 + $0x40] sm:$0xff]
        %v554 = vld [vmem:[#allocation2 + $0x48] sm:$0xff]
        %v555 = vld [vmem:[#allocation2 + $0x50] sm:$0xff]
        %v556 = vld [vmem:[#allocation2 + $0x58] sm:$0xff]
        %v557 = vld [vmem:[#allocation2 + $0x60] sm:$0xff]
        %v558 = vld [vmem:[#allocation2 + $0x68] sm:$0xff]
        %v559 = vld [vmem:[#allocation2 + $0x70] sm:$0xff]
        %v560 = vld [vmem:[#allocation2 + $0x78] sm:$0xff]
        %v561 = vpack.c.bf16 %v530, %v529
        %v562 = vpack.c.bf16 %v532, %v531
        %v563 = vpack.c.bf16 %v534, %v533
        %v564 = vpack.c.bf16 %v536, %v535
        %v565 = vpack.c.bf16 %v538, %v537
        %v566 = vpack.c.bf16 %v540, %v539
        %v567 = vpack.c.bf16 %v542, %v541
        %v568 = vpack.c.bf16 %v544, %v543
        %v569 = vld [vmem:[#allocation8] sm:$0xf]
        %v570 = vld [vmem:[#allocation8 + $0x4] sm:$0xf]
        %v571 = vld [vmem:[#allocation8 + $0x8] sm:$0xf]
        %v572 = vld [vmem:[#allocation8 + $0xc] sm:$0xf]
        %v573 = vld [vmem:[#allocation8 + $0x10] sm:$0xf]
        %v574 = vld [vmem:[#allocation8 + $0x14] sm:$0xf]
        %v575 = vld [vmem:[#allocation8 + $0x18] sm:$0xf]
        %v576 = vld [vmem:[#allocation8 + $0x1c] sm:$0xf]
        %v577 = vld [vmem:[#allocation8 + $0x20] sm:$0xf]
        %v578 = vld [vmem:[#allocation8 + $0x24] sm:$0xf]
        %v579 = vld [vmem:[#allocation8 + $0x28] sm:$0xf]
        %v580 = vld [vmem:[#allocation8 + $0x2c] sm:$0xf]
        %v581 = vld [vmem:[#allocation8 + $0x30] sm:$0xf]
        %v582 = vld [vmem:[#allocation8 + $0x34] sm:$0xf]
        %v583 = vld [vmem:[#allocation8 + $0x38] sm:$0xf]
        %v584 = vld [vmem:[#allocation8 + $0x3c] sm:$0xf]
        %v601 = vunpack.c.l.b16 %v569
        %v602 = vunpack.c.l.b16 %v570
        %v603 = vunpack.c.l.b16 %v571
        %v604 = vunpack.c.l.b16 %v572
        %v605 = vunpack.c.l.b16 %v573
        %v606 = vunpack.c.l.b16 %v574
        %v607 = vunpack.c.l.b16 %v575
        %v608 = vunpack.c.l.b16 %v576
        %v609 = vunpack.c.l.b16 %v577
        %v610 = vunpack.c.l.b16 %v578
        %v611 = vunpack.c.l.b16 %v579
        %v612 = vunpack.c.l.b16 %v580
        %v613 = vunpack.c.l.b16 %v581
        %v614 = vunpack.c.l.b16 %v582
        %v615 = vunpack.c.l.b16 %v583
        %v616 = vunpack.c.l.b16 %v584
        %v617 = vpack.c.b16 %v602, %v601
        %v618 = vpack.c.b16 %v604, %v603
        %v619 = vpack.c.b16 %v606, %v605
        %v620 = vpack.c.b16 %v608, %v607
        %v621 = vpack.c.b16 %v610, %v609
        %v622 = vpack.c.b16 %v612, %v611
        %v623 = vpack.c.b16 %v614, %v613
        %v624 = vpack.c.b16 %v616, %v615
        %633 = vmatprep.subr.bf16.mxu0 0
        %634 = vmatpush1.bf16.msra.mxu0 %v624
        %635 = vmatprep.subr.bf16.mxu0 0
        %636 = vmatpush1.bf16.msra.mxu0 %v623
        %637 = vmatprep.subr.bf16.mxu0 0
        %638 = vmatpush1.bf16.msra.mxu0 %v622
        %639 = vmatprep.subr.bf16.mxu0 0
        %640 = vmatpush1.bf16.msra.mxu0 %v621
        %641 = vmatprep.subr.bf16.mxu0 0
        %642 = vmatpush1.bf16.msra.mxu0 %v620
        %643 = vmatprep.subr.bf16.mxu0 0
        %644 = vmatpush1.bf16.msra.mxu0 %v619
        %645 = vmatprep.subr.bf16.mxu0 0
        %646 = vmatpush1.bf16.msra.mxu0 %v618
        %647 = vmatprep.subr.bf16.mxu0 0
        %648 = vmatpush1.bf16.msra.mxu0 %v617
        %649 = vmatprep.subr.bf16.mxu0 0
        %650 = vmatpush2.bf16.msra.mxu0 0
        %651 = vmatprep.subr.bf16.mxu0 0
        %652 = vmatpush2.bf16.msra.mxu0 0
        %653 = vmatprep.subr.bf16.mxu0 0
        %654 = vmatpush2.bf16.msra.mxu0 0
        %655 = vmatprep.subr.bf16.mxu0 0
        %656 = vmatpush2.bf16.msra.mxu0 0
        %657 = vmatprep.subr.bf16.mxu0 0
        %658 = vmatpush2.bf16.msra.mxu0 0
        %659 = vmatprep.subr.bf16.mxu0 0
        %660 = vmatpush2.bf16.msra.mxu0 0
        %661 = vmatprep.subr.bf16.mxu0 0
        %662 = vmatpush2.bf16.msra.mxu0 0
        %663 = vmatprep.subr.bf16.mxu0 0
        %664 = vmatpush2.bf16.msra.mxu0 0
        %665 = vmatprep.mubr.bf16.mxu0 0
        %666 = vmatmul.mubr.bf16.gmra.mxu0 %v561
        %v667 = vpop.f32.mrf.mxu0
        %v668 = vadd.f32 0.0, %v667
        %v669 = vpop.f32.mrf.mxu0
        %v670 = vpop.f32.mrf.mxu0
        %v671 = vadd.f32 0.0, %v670
        %v672 = vpop.f32.mrf.mxu0
        %673 = vmatprep.mubr.bf16.mxu0 0
        %674 = vmatmul.mubr.bf16.gmra.mxu0 %v562
        %v675 = vpop.f32.mrf.mxu0
        %v676 = vadd.f32 0.0, %v675
        %v677 = vpop.f32.mrf.mxu0
        %v678 = vpop.f32.mrf.mxu0
        %v679 = vadd.f32 0.0, %v678
        %v680 = vpop.f32.mrf.mxu0
        %681 = vmatprep.mubr.bf16.mxu0 0
        %682 = vmatmul.mubr.bf16.gmra.mxu0 %v563
        %v683 = vpop.f32.mrf.mxu0
        %v684 = vadd.f32 0.0, %v683
        %v685 = vpop.f32.mrf.mxu0
        %v686 = vpop.f32.mrf.mxu0
        %v687 = vadd.f32 0.0, %v686
        %v688 = vpop.f32.mrf.mxu0
        %689 = vmatprep.mubr.bf16.mxu0 0
        %690 = vmatmul.mubr.bf16.gmra.mxu0 %v564
        %v691 = vpop.f32.mrf.mxu0
        %v692 = vadd.f32 0.0, %v691
        %v693 = vpop.f32.mrf.mxu0
        %v694 = vpop.f32.mrf.mxu0
        %v695 = vadd.f32 0.0, %v694
        %v696 = vpop.f32.mrf.mxu0
        %697 = vmatprep.mubr.bf16.mxu0 0
        %698 = vmatmul.mubr.bf16.gmra.mxu0 %v565
        %v699 = vpop.f32.mrf.mxu0
        %v700 = vadd.f32 0.0, %v699
        %v701 = vpop.f32.mrf.mxu0
        %v702 = vpop.f32.mrf.mxu0
        %v703 = vadd.f32 0.0, %v702
        %v704 = vpop.f32.mrf.mxu0
        %705 = vmatprep.mubr.bf16.mxu0 0
        %706 = vmatmul.mubr.bf16.gmra.mxu0 %v566
        %v707 = vpop.f32.mrf.mxu0
        %v708 = vadd.f32 0.0, %v707
        %v709 = vpop.f32.mrf.mxu0
        %v710 = vpop.f32.mrf.mxu0
        %v711 = vadd.f32 0.0, %v710
        %v712 = vpop.f32.mrf.mxu0
        %713 = vmatprep.mubr.bf16.mxu0 0
        %714 = vmatmul.mubr.bf16.gmra.mxu0 %v567
        %v715 = vpop.f32.mrf.mxu0
        %v716 = vadd.f32 0.0, %v715
        %v717 = vpop.f32.mrf.mxu0
        %v718 = vpop.f32.mrf.mxu0
        %v719 = vadd.f32 0.0, %v718
        %v720 = vpop.f32.mrf.mxu0
        %721 = vmatprep.mubr.bf16.mxu0 0
        %722 = vmatmul.mubr.bf16.gmra.mxu0 %v568
        %v723 = vpop.f32.mrf.mxu0
        %v724 = vadd.f32 0.0, %v723
        %v725 = vpop.f32.mrf.mxu0
        %v726 = vpop.f32.mrf.mxu0
        %v727 = vadd.f32 0.0, %v726
        %v728 = vpop.f32.mrf.mxu0
        %729 = vdwg.mxu0
        %v730 = vadd.f32 %v545, %v668
        %v731 = vadd.f32 %v546, %v671
        %v732 = vadd.f32 %v547, %v676
        %v733 = vadd.f32 %v548, %v679
        %v734 = vadd.f32 %v549, %v684
        %v735 = vadd.f32 %v550, %v687
        %v736 = vadd.f32 %v551, %v692
        %v737 = vadd.f32 %v552, %v695
        %v738 = vadd.f32 %v553, %v700
        %v739 = vadd.f32 %v554, %v703
        %v740 = vadd.f32 %v555, %v708
        %v741 = vadd.f32 %v556, %v711
        %v742 = vadd.f32 %v557, %v716
        %v743 = vadd.f32 %v558, %v719
        %v744 = vadd.f32 %v559, %v724
        %v745 = vadd.f32 %v560, %v727
        %746 = vst [vmem:[#allocation2] sm:$0xff] %v730
        %747 = vst [vmem:[#allocation2 + $0x8] sm:$0xff] %v731
        %748 = vst [vmem:[#allocation2 + $0x10] sm:$0xff] %v732
        %749 = vst [vmem:[#allocation2 + $0x18] sm:$0xff] %v733
        %750 = vst [vmem:[#allocation2 + $0x20] sm:$0xff] %v734
        %751 = vst [vmem:[#allocation2 + $0x28] sm:$0xff] %v735
        %752 = vst [vmem:[#allocation2 + $0x30] sm:$0xff] %v736
        %753 = vst [vmem:[#allocation2 + $0x38] sm:$0xff] %v737
        %754 = vst [vmem:[#allocation2 + $0x40] sm:$0xff] %v738
        %755 = vst [vmem:[#allocation2 + $0x48] sm:$0xff] %v739
        %756 = vst [vmem:[#allocation2 + $0x50] sm:$0xff] %v740
        %757 = vst [vmem:[#allocation2 + $0x58] sm:$0xff] %v741
        %758 = vst [vmem:[#allocation2 + $0x60] sm:$0xff] %v742
        %759 = vst [vmem:[#allocation2 + $0x68] sm:$0xff] %v743
        %760 = vst [vmem:[#allocation2 + $0x70] sm:$0xff] %v744
        %761 = vst [vmem:[#allocation2 + $0x78] sm:$0xff] %v745
        // Predicated region
        $region57: #{tpu_custom_call.1} parent=39 // pred_check
          %p762 = pneg %p317
        $region58: #{tpu_custom_call.1} parent=39 // pred_check_branch
          %764 = sbr.rel (%p762) target = $region60
        $region59: #{tpu_custom_call.1} parent=39 // pred_region
          %v765 = vld [vmem:[#allocation2] sm:$0xff]
          %v766 = vld [vmem:[#allocation2 + $0x8] sm:$0xff]
          %v767 = vld [vmem:[#allocation2 + $0x10] sm:$0xff]
          %v768 = vld [vmem:[#allocation2 + $0x18] sm:$0xff]
          %v769 = vld [vmem:[#allocation2 + $0x20] sm:$0xff]
          %v770 = vld [vmem:[#allocation2 + $0x28] sm:$0xff]
          %v771 = vld [vmem:[#allocation2 + $0x30] sm:$0xff]
          %v772 = vld [vmem:[#allocation2 + $0x38] sm:$0xff]
          %v773 = vld [vmem:[#allocation2 + $0x40] sm:$0xff]
          %v774 = vld [vmem:[#allocation2 + $0x48] sm:$0xff]
          %v775 = vld [vmem:[#allocation2 + $0x50] sm:$0xff]
          %v776 = vld [vmem:[#allocation2 + $0x58] sm:$0xff]
          %v777 = vld [vmem:[#allocation2 + $0x60] sm:$0xff]
          %v778 = vld [vmem:[#allocation2 + $0x68] sm:$0xff]
          %v779 = vld [vmem:[#allocation2 + $0x70] sm:$0xff]
          %v780 = vld [vmem:[#allocation2 + $0x78] sm:$0xff]
          %v781 = vld [vmem:[%s4] sm:$0x1]
          %v783 = vlaneseq
          %v784 = vshrl.u32 %v783, 7
          %v785 = vsub.s32 0, %v784
          %v786 = vrot.slane %v781, %v785
          %v788 = vadd.f32 %v765, %v786
          %v789 = vadd.f32 %v766, %v786
          %v790 = vadd.f32 %v767, %v786
          %v791 = vadd.f32 %v768, %v786
          %v792 = vadd.f32 %v769, %v786
          %v793 = vadd.f32 %v770, %v786
          %v794 = vadd.f32 %v771, %v786
          %v795 = vadd.f32 %v772, %v786
          %v796 = vadd.f32 %v773, %v786
          %v797 = vadd.f32 %v774, %v786
          %v798 = vadd.f32 %v775, %v786
          %v799 = vadd.f32 %v776, %v786
          %v800 = vadd.f32 %v777, %v786
          %v801 = vadd.f32 %v778, %v786
          %v802 = vadd.f32 %v779, %v786
          %v803 = vadd.f32 %v780, %v786
          %804 = vst [vmem:[%s309] sm:$0xff] %v788
          %805 = vst [vmem:[%s309 + $0x8] sm:$0xff] %v789
          %806 = vst [vmem:[%s309 + $0x10] sm:$0xff] %v790
          %807 = vst [vmem:[%s309 + $0x18] sm:$0xff] %v791
          %808 = vst [vmem:[%s309 + $0x20] sm:$0xff] %v792
          %809 = vst [vmem:[%s309 + $0x28] sm:$0xff] %v793
          %810 = vst [vmem:[%s309 + $0x30] sm:$0xff] %v794
          %811 = vst [vmem:[%s309 + $0x38] sm:$0xff] %v795
          %812 = vst [vmem:[%s309 + $0x40] sm:$0xff] %v796
          %813 = vst [vmem:[%s309 + $0x48] sm:$0xff] %v797
          %814 = vst [vmem:[%s309 + $0x50] sm:$0xff] %v798
          %815 = vst [vmem:[%s309 + $0x58] sm:$0xff] %v799
          %816 = vst [vmem:[%s309 + $0x60] sm:$0xff] %v800
          %817 = vst [vmem:[%s309 + $0x68] sm:$0xff] %v801
          %818 = vst [vmem:[%s309 + $0x70] sm:$0xff] %v802
          %819 = vst [vmem:[%s309 + $0x78] sm:$0xff] %v803
        $region60: #{tpu_custom_call.1} parent=39 // pred_fallthru
          _
        %s820 = sand.u32 %s168, 1
        %s821 = scalar_lea.sflag [#allocation5], %s820
        %s822 = sand.u32 %s168, 1
        %s823 = smul.addr %s822, 128
        %s824 = scalar_lea.vmem [#allocation9], %s823
        // Predicated region
        $region61: #{tpu_custom_call.1} parent=39 // pred_check
          %p825 = pneg %p178
        $region62: #{tpu_custom_call.1} parent=39 // pred_check_branch
          %827 = sbr.rel (%p825) target = $region64
        $region63: #{tpu_custom_call.1} parent=39 // pred_region
          %s828 = smul.u32 16, %s27
          %s830 = ssub.s32 2048, 2048
          %831 = vsyncadd %s821, %s830
          %s832 = smul.addr %s828, 128
          %s833 = scalar_lea.hbm %s5, %s832
          %s834 = sshll.u32 %s824, 4
          %s835 = int_to_ptr.vmem [resolvable:$true] %s834
          %840 = dma.vmem_to_hbm [thread:$0]  %s835, 2048, %s833, %s821, 128, 128, 8
        $region64: #{tpu_custom_call.1} parent=39 // pred_fallthru
          _
      $region40: #{tpu_custom_call.1} parent=5 // pred_fallthru
        _
      %p841 = scmp.le.s32.totalorder 2, %s18
      // Predicated region
      $region65: #{tpu_custom_call.1} parent=5 // pred_check
        %p842 = pneg %p841
      $region66: #{tpu_custom_call.1} parent=5 // pred_check_branch
        %844 = sbr.rel (%p842) target = $region68
      $region67: #{tpu_custom_call.1} parent=5 // pred_region
        %s845 = ssub.s32 %s18, 2
        // Predicated region
        $region69: #{tpu_custom_call.1} parent=67 // pred_check
          %p846 = pneg %p184
        $region70: #{tpu_custom_call.1} parent=67 // pred_check_branch
          %848 = sbr.rel (%p846) target = $region72
        $region71: #{tpu_custom_call.1} parent=67 // pred_region
          %s849 = sand.u32 %s169, 1
          %s850 = scalar_lea.sflag [#allocation5], %s849
          %s851 = sand.u32 %s169, 1
          %s852 = smul.addr %s851, 128
          %s853 = scalar_lea.vmem [#allocation9], %s852
          %854 = dma.done %s850, 2048
        $region72: #{tpu_custom_call.1} parent=67 // pred_fallthru
          _
      $region68: #{tpu_custom_call.1} parent=5 // pred_fallthru
        _
    $region6: #{tpu_custom_call.1} parent=1 // loop_footer
      %s22 = sadd.s32 1, %s18
    $region7: #{tpu_custom_call.1} parent=1 // loop_footer_branch
      %17 = sbr.rel target = $region3
    $region8: #{tpu_custom_call.1} parent=1 // loop_exit
      _
    %855 = vsyncpa [#allocation4], 1
    %s856 = scalar_lea.sflag [#allocation4], 1
    %857 = vsyncpa %s856, 1
    %858 = vsyncpa [#allocation7], 1
    %859 = vsyncpa [#allocation5], 1
    %s860 = scalar_lea.sflag [#allocation5], 1
    %861 = vsyncpa %s860, 1

</llo_original>
